<compile_context>
chip_gen: v6e
topology: v6e:2x2x1
jax: 0.10.0
libtpu: 0.0.40
codegen_flags: <defaults>
</compile_context>

<pallas_src>
import functools

import jax
import jax.numpy as jnp
from jax.experimental import pallas as pl
from jax.experimental.pallas import tpu as pltpu


def _round_up(a: int, b: int) -> int:
    return ((a + b - 1) // b) * b


# Below this many FLOPs a fused XLA dot beats pallas_call launch + pipeline
# prologue + per-grid-step overhead.
_DEFAULT_MIN_KERNEL_FLOPS = 3 * 10**7

# If the (128-padded) spectral dimension fits in one tile of this size, skip
# K-tiling entirely (no accumulator). Covers typical spharmnet L values.
_MAX_SINGLE_K = 2048
_MAX_TN = 2048
_TILED_TK = 512


# ---------------------------------------------------------------------------
# VMEM budgeting
# ---------------------------------------------------------------------------

def _tile_vmem_bytes(tm, tk, tn, in_item, out_item, with_acc):
    """Double-buffered x/Y/out tiles (+ f32 acc for the K-tiled variant)."""
    b = 2 * (tm * tk * in_item + tk * tn * in_item + tm * tn * out_item)
    if with_acc:
        b += tm * tn * 4
    return b


def _vmem_budget_bytes() -> int:
    """Per-generation budget for double-buffered tiles (leave headroom)."""
    try:
        cap = int(pltpu.get_tpu_info().vmem_capacity_bytes)
        return min(int(cap * 0.7), 96 << 20)   # ~45 MiB on v7x, ~90 MiB v5e/v6e
    except Exception:
        return 40 << 20                        # safe on every generation


def _pick_vmem_limit(peak_bytes: int) -> int:
    """Explicit scoped-VMEM limit: defaults (16/32 MiB) are too small for the
    larger tiles; never exceed ~85% of physical VMEM."""
    cap = 56 << 20                             # conservative (v7x has 64 MiB)
    try:
        cap = min(int(pltpu.get_tpu_info().vmem_capacity_bytes * 0.85), 112 << 20)
    except Exception:
        pass
    return max(32 << 20, min(peak_bytes * 5 // 4 + (4 << 20), cap))


def _fit_tiles(n_pad128, tk, single_k, in_item, out_item, budget, tn_user):
    """Pick (tm_cap, tn). Large tm first (Y is re-streamed once per M tile),
    then the largest lane-dense tn that still fits the VMEM budget."""
    with_acc = not single_k
    for tm_cap in (512, 384, 256, 192, 128, 64, 32, 16, 8):
        if tn_user is not None:
            if _tile_vmem_bytes(tm_cap, tk, tn_user, in_item, out_item,
                                with_acc) <= budget:
                return tm_cap, tn_user
            continue
        tn = min(_MAX_TN, n_pad128)
        while tn > 128 and _tile_vmem_bytes(tm_cap, tk, tn, in_item, out_item,
                                            with_acc) > budget:
            tn -= 128
        if _tile_vmem_bytes(tm_cap, tk, tn, in_item, out_item,
                            with_acc) <= budget:
            return tm_cap, tn
    return 8, (tn_user if tn_user is not None else 128)


# ---------------------------------------------------------------------------
# Kernels
# ---------------------------------------------------------------------------

def _isht_kernel_single(x_ref, y_ref, o_ref):
    """One (tm, tn) output tile, full K in one MXU pass (no accumulator)."""
    o_ref[...] = jnp.dot(
        x_ref[...], y_ref[...], preferred_element_type=jnp.float32
    ).astype(o_ref.dtype)


def _isht_kernel_ktiled(x_ref, y_ref, o_ref, acc_ref):
    """One (tm, tn) output tile, accumulated over the innermost K grid axis."""

    @pl.when(pl.program_id(2) == 0)
    def _init():
        acc_ref[...] = jnp.zeros_like(acc_ref)

    acc_ref[...] += jnp.dot(
        x_ref[...], y_ref[...], preferred_element_type=jnp.float32
    )

    @pl.when(pl.program_id(2) == pl.num_programs(2) - 1)
    def _finalize():
        o_ref[...] = acc_ref[...].astype(o_ref.dtype)


# ---------------------------------------------------------------------------
# Fused per-call path (cast + pad + pallas_call + slice under one jit)
# ---------------------------------------------------------------------------

@functools.partial(
    jax.jit,
    static_argnames=("tm", "tn", "tk", "m_pad", "k_pad", "n_vertex",
                     "single_k", "vmem_limit", "compute_dtype"),
)
def _isht_forward(x, y_padded, *, tm, tn, tk, m_pad, k_pad, n_vertex,
                  single_k, vmem_limit, compute_dtype):
    batch, n_ch, K = x.shape
    out_dtype = x.dtype
    M = batch * n_ch

    x2d = x.astype(compute_dtype).reshape(M, K)
    # Zero-padded x columns only hit zero-padded Y rows -> exact x @ Y[:K, :].
    x2d = jnp.pad(x2d, ((0, m_pad - M), (0, k_pad - K)))

    N = y_padded.shape[1]
    grid_m, grid_n = m_pad // tm, N // tn

    cost = pl.CostEstimate(
        flops=2 * m_pad * k_pad * N,
        transcendentals=0,
        bytes_accessed=(
            x2d.size * x2d.dtype.itemsize * grid_n
            + y_padded.size * y_padded.dtype.itemsize * grid_m
            + m_pad * N * jnp.dtype(out_dtype).itemsize
        ),
    )
    cparams = pltpu.CompilerParams(
        dimension_semantics=(("parallel", "parallel") if single_k
                             else ("parallel", "parallel", "arbitrary")),
        vmem_limit_bytes=vmem_limit,
    )

    if single_k:
        out2d = pl.pallas_call(
            _isht_kernel_single,
            out_shape=jax.ShapeDtypeStruct((m_pad, N), out_dtype),
            grid_spec=pltpu.PrefetchScalarGridSpec(
                num_scalar_prefetch=0,
                grid=(grid_m, grid_n),
                in_specs=[
                    pl.BlockSpec((tm, k_pad), lambda i, j: (i, 0)),  # x panel
                    pl.BlockSpec((k_pad, tn), lambda i, j: (0, j)),  # basis
                ],
                out_specs=pl.BlockSpec((tm, tn), lambda i, j: (i, j)),
            ),
            compiler_params=cparams,
            cost_estimate=cost,
        )(x2d, y_padded)
    else:
        grid_k = k_pad // tk
        out2d = pl.pallas_call(
            _isht_kernel_ktiled,
            out_shape=jax.ShapeDtypeStruct((m_pad, N), out_dtype),
            grid_spec=pltpu.PrefetchScalarGridSpec(
                num_scalar_prefetch=0,
                grid=(grid_m, grid_n, grid_k),
                in_specs=[
                    pl.BlockSpec((tm, tk), lambda i, j, k: (i, k)),
                    pl.BlockSpec((tk, tn), lambda i, j, k: (k, j)),
                ],
                out_specs=pl.BlockSpec((tm, tn), lambda i, j, k: (i, j)),
                scratch_shapes=[pltpu.VMEM((tm, tn), jnp.float32)],
            ),
            compiler_params=cparams,
            cost_estimate=cost,
        )(x2d, y_padded)

    # Trailing slice + reshape fuse with the kernel epilogue under this jit.
    return out2d[:M, :n_vertex].reshape(batch, n_ch, n_vertex)


# ---------------------------------------------------------------------------
# Module
# ---------------------------------------------------------------------------

class ISHT:
    """JAX/Pallas port of spharmnet ISHT.

    Y : [(L+1)**2, n_vertex] harmonic basis.
    __call__(x): x [batch, n_ch, K] (K <= (L+1)**2) -> [batch, n_ch, n_vertex].

    compute_dtype=jnp.bfloat16 halves Y's HBM traffic (f32 accumulation is
    kept on the MXU); results then differ from the f32 reference at ~1e-2
    relative level.  Default (None) computes in the input dtype, matching the
    PyTorch module exactly for f32 inputs.
    """

    def __init__(self, Y, *, compute_dtype=None, tn=None, tk=None,
                 min_kernel_flops=_DEFAULT_MIN_KERNEL_FLOPS):
        Y = jnp.asarray(Y)
        self.Y = Y                                  # un-padded (fallback path)
        self.n_coeff, self.n_vertex = Y.shape
        self.compute_dtype = compute_dtype
        self.min_kernel_flops = min_kernel_flops

        k_pad128 = _round_up(self.n_coeff, 128)
        n_pad128 = _round_up(self.n_vertex, 128)

        # --- K handling: single pass (common case) vs tiled accumulation ----
        if tk is None:
            self.single_k = k_pad128 <= _MAX_SINGLE_K
            self.tk = k_pad128 if self.single_k else _TILED_TK
        else:
            tk = _round_up(int(tk), 128)
            self.single_k = tk >= k_pad128
            self.tk = k_pad128 if self.single_k else tk
        self.k_pad = _round_up(k_pad128, self.tk)

        # --- Fit (tm_cap, tn) against the per-generation VMEM budget --------
        in_item = (jnp.dtype(compute_dtype).itemsize
                   if compute_dtype is not None else 4)
        out_item = 4                                # worst case (f32 output)
        budget = _vmem_budget_bytes()
        tn_user = None if tn is None else _round_up(int(tn), 128)
        self.tm_cap, tn_sel = _fit_tiles(
            n_pad128, self.tk, self.single_k, in_item, out_item, budget, tn_user)

        # v7x megacore balance: if one N tile would cover the whole (non-tiny)
        # vertex axis, split it in two so both TensorCores get work.
        if tn_user is None and tn_sel >= n_pad128 and n_pad128 >= 512:
            tn_sel = _round_up((n_pad128 + 1) // 2, 128)

        self.tn = tn_sel
        self.n_pad = _round_up(n_pad128, self.tn)

        # Pad the basis ONCE (zero rows/cols never contribute) so no per-call
        # slice/copy of Y is materialized; cast once if bf16 compute requested.
        Yc = Y.astype(compute_dtype) if compute_dtype is not None else Y
        self.Y_padded = jnp.pad(
            Yc,
            ((0, self.k_pad - self.n_coeff), (0, self.n_pad - self.n_vertex)),
        )

    def __call__(self, x):
        batch, n_ch, K = x.shape
        assert K <= self.n_coeff
        M = batch * n_ch

        # Tiny problems: plain XLA dot beats kernel launch + pipeline prologue.
        if 2 * M * K * self.n_vertex < self.min_kernel_flops:
            return jnp.matmul(x, self.Y[:K, :].astype(x.dtype))

        cdt = jnp.dtype(self.compute_dtype if self.compute_dtype is not None
                        else x.dtype)
        # bf16 packs 16 rows per vreg sublane group -> round M tile to 16 so
        # x / output vregs stay fully packed; f32 needs only 8.
        m_align = 16 if cdt.itemsize <= 2 else 8
        tm = min(_round_up(M, m_align), self.tm_cap)
        m_pad = _round_up(M, tm)

        peak = _tile_vmem_bytes(tm, self.tk, self.tn, cdt.itemsize,
                                jnp.dtype(x.dtype).itemsize, not self.single_k)
        vmem_limit = _pick_vmem_limit(peak)

        return _isht_forward(
            x, self.Y_padded,
            tm=tm, tn=self.tn, tk=self.tk,
            m_pad=m_pad, k_pad=self.k_pad, n_vertex=self.n_vertex,
            single_k=self.single_k, vmem_limit=vmem_limit, compute_dtype=cdt,
        )


if __name__ == "__main__":
    key = jax.random.PRNGKey(0)
    k1, k2, k3, k4 = jax.random.split(key, 4)

    # --- Case 1: single-K kernel (the common spharmnet case), f32 -----------
    #   L = 5 -> 36 spectral coefficients, n_vertex = 162 (icosphere level 2)
    L = 5
    n_coeff = (L + 1) ** 2        # 36
    n_vertex = 162
    batch, n_ch, K = 2, 4, 25

    Y = jax.random.normal(k1, (n_coeff, n_vertex), dtype=jnp.float32)
    x = jax.random.normal(k2, (batch, n_ch, K), dtype=jnp.float32)
    ref = jnp.matmul(x, Y[:K, :])   # mirrors torch.matmul(x, Y[:K, :])

    isht = ISHT(Y, min_kernel_flops=0)              # force the Pallas path
    out = jax.block_until_ready(isht(x))
    assert out.shape == (batch, n_ch, n_vertex), out.shape
    assert jnp.allclose(out, ref, atol=1e-4, rtol=1e-4), float(
        jnp.max(jnp.abs(out - ref)))

    # Default threshold: this tiny problem takes the fused XLA fallback.
    out_fb = jax.block_until_ready(ISHT(Y)(x))
    assert jnp.allclose(out_fb, ref, atol=1e-5, rtol=1e-5)

    # bf16 operand path (halves Y HBM traffic; f32 accumulation on the MXU).
    isht_bf = ISHT(Y, compute_dtype=jnp.bfloat16, min_kernel_flops=0)
    out_bf = jax.block_until_ready(isht_bf(x))
    assert out_bf.shape == (batch, n_ch, n_vertex)
    assert jnp.allclose(out_bf, ref, atol=0.3, rtol=0.1), float(
        jnp.max(jnp.abs(out_bf - ref)))

    # --- Case 2: K-tiled accumulator kernel (forced via a small tk) ---------
    n_coeff2, n_vertex2 = 300, 200
    batch2, n_ch2, K2 = 2, 3, 300
    Y2 = jax.random.normal(k3, (n_coeff2, n_vertex2), dtype=jnp.float32)
    x2 = jax.random.normal(k4, (batch2, n_ch2, K2), dtype=jnp.float32)
    ref2 = jnp.matmul(x2, Y2[:K2, :])

    isht2 = ISHT(Y2, tk=128, min_kernel_flops=0)    # grid_k = 3 -> acc path
    out2 = jax.block_until_ready(isht2(x2))
    assert out2.shape == (batch2, n_ch2, n_vertex2), out2.shape
    assert jnp.allclose(out2, ref2, atol=1e-4, rtol=1e-4), float(
        jnp.max(jnp.abs(out2 - ref2)))

    print("KERNEL_OK")
</pallas_src>

<mosaic_0001>
module attributes {stable_mosaic.version = 11 : i64} {
  func.func @_isht_kernel_single(%arg0: i32, %arg1: i32, %arg2: memref<8x128xf32, #tpu.memory_space<vmem>>, %arg3: memref<128x256xf32, #tpu.memory_space<vmem>>, %arg4: memref<8x256xf32, #tpu.memory_space<vmem>>) attributes {dimension_semantics = [#tpu.dimension_semantics<parallel>, #tpu.dimension_semantics<parallel>], iteration_bounds = array<i64: 1, 1>, scalar_prefetch = 0 : i64, scratch_operands = 0 : i64, tpu.core_type = #tpu.core_type<tc>, window_params = [{transform_indices = @transform_0, window_bounds = array<i64: 8, 128>}, {transform_indices = @transform_1, window_bounds = array<i64: 128, 256>}, {transform_indices = @transform_2, window_bounds = array<i64: 8, 256>}]} {
    %c0 = arith.constant 0 : index
    %c0_0 = arith.constant 0 : index
    %0 = vector.load %arg2[%c0, %c0_0] : memref<8x128xf32, #tpu.memory_space<vmem>>, vector<8x128xf32>
    %c0_1 = arith.constant 0 : index
    %c0_2 = arith.constant 0 : index
    %1 = vector.load %arg3[%c0_1, %c0_2] : memref<128x256xf32, #tpu.memory_space<vmem>>, vector<128x256xf32>
    %cst = arith.constant dense<0.000000e+00> : vector<8x256xf32>
    %2 = tpu.matmul %0, %1, %cst {dimension_numbers = #tpu.dot_dimension_numbers<[1], [0], [0], [1], [0, 0, 1, 1], [], []>} : vector<8x128xf32>, vector<128x256xf32>, vector<8x256xf32> -> vector<8x256xf32>
    %c0_3 = arith.constant 0 : index
    %c0_4 = arith.constant 0 : index
    %3 = vector.load %arg4[%c0_3, %c0_4] : memref<8x256xf32, #tpu.memory_space<vmem>>, vector<8x256xf32>
    tpu.vector_store %arg4[%c0_3, %c0_4], %2 {strides = array<i32>} : memref<8x256xf32, #tpu.memory_space<vmem>>, vector<8x256xf32>,
    return
  }
  func.func @transform_0(%arg0: i32, %arg1: i32) -> (i32, i32) {
    %c0_i32 = arith.constant 0 : i32
    %c0_i32_0 = arith.constant 0 : i32
    return %arg0, %c0_i32 : i32, i32
  }
  func.func @transform_1(%arg0: i32, %arg1: i32) -> (i32, i32) {
    %c0_i32 = arith.constant 0 : i32
    %c0_i32_0 = arith.constant 0 : i32
    return %c0_i32, %arg1 : i32, i32
  }
  func.func @transform_2(%arg0: i32, %arg1: i32) -> (i32, i32) {
    %c0_i32 = arith.constant 0 : i32
    return %arg0, %arg1 : i32, i32
  }
}

</mosaic_0001>

<llo_original>
// kernel: _isht_forward.1
$region0: #{_isht_forward.1}
  #allocation0 [shape = 'u32[]', space=smem, size = 0x4, offset = 0x4, fixed_abs, tag = 'smem constant byte address 0x4 - core index']
  #allocation1 [shape = 'u32[144,128]{1,0:T(1,128)}', space=vmem, size = 0x12000, scoped, tag = 'internal scratch']
  %s0 = inlined_call_operand.vmem [shape: f32[8,128], index: 0, kind: input, shape index: {}]
  %s1 = inlined_call_operand.hbm [shape: f32[128,256], index: 1, kind: input, shape index: {}]
  %s2 = inlined_call_operand.vmem [shape: f32[8,256], index: 2, kind: output, shape index: {}]
  %s3 = sld [smem:[#allocation0]]
  $region22: #{_isht_forward.1} parent=0
    _
  %s5 = ssub.s32 1, %s3
  %s6 = scalar_select 0, %s5, %s3
  $region1: #{_isht_forward.1} parent=0
    #allocation2 [shape = 'u8[131072]{0}', space=vmem, size = 0x20000, scoped, tag = 'input window, operand 1, single buffered']
    #allocation3 [shape = 's32[1]{0}', space=sflag, size = 0x4, scoped, tag = 'scoped memory for _isht_forward.1']
    %7 = vsyncpa [#allocation3], 0
    // Predicated region
    $region2: #{_isht_forward.1} parent=1 // pred_check
      _
    $region3: #{_isht_forward.1} parent=1 // pred_check_branch
      %9 = sbr.rel (0) target = $region5
    $region4: #{_isht_forward.1} parent=1 // pred_region
      _
    $region5: #{_isht_forward.1} parent=1 // pred_fallthru
      _
    // Predicated region
    $region6: #{_isht_forward.1} parent=1 // pred_check
      _
    $region7: #{_isht_forward.1} parent=1 // pred_check_branch
      %11 = sbr.rel (0) target = $region9
    $region8: #{_isht_forward.1} parent=1 // pred_region
      %s13 = ssub.s32 4096, 4096
      %14 = vsyncadd [#allocation3], %s13
      %s15 = sshll.u32 [#allocation2], 4
      %s16 = int_to_ptr.vmem [resolvable:$true] %s15
      %21 = dma.hbm_to_vmem [thread:$0]  %s1, 4096, %s16, [#allocation3], 256, 256, 16
    $region9: #{_isht_forward.1} parent=1 // pred_fallthru
      _
    // Predicated region
    $region10: #{_isht_forward.1} parent=1 // pred_check
      _
    $region11: #{_isht_forward.1} parent=1 // pred_check_branch
      %23 = sbr.rel (0) target = $region13
    $region12: #{_isht_forward.1} parent=1 // pred_region
      %24 = dma.done [#allocation3], 4096
    $region13: #{_isht_forward.1} parent=1 // pred_fallthru
      _
    %v25 = vld [vmem:[%s0] sm:$0xff]
    %v26 = vld [vmem:[#allocation2] sm:$0xff]
    %v27 = vld [vmem:[#allocation2 + $0x8] sm:$0xff]
    %v28 = vld [vmem:[#allocation2 + $0x10] sm:$0xff]
    %v29 = vld [vmem:[#allocation2 + $0x18] sm:$0xff]
    %v30 = vld [vmem:[#allocation2 + $0x20] sm:$0xff]
    %v31 = vld [vmem:[#allocation2 + $0x28] sm:$0xff]
    %v32 = vld [vmem:[#allocation2 + $0x30] sm:$0xff]
    %v33 = vld [vmem:[#allocation2 + $0x38] sm:$0xff]
    %v34 = vld [vmem:[#allocation2 + $0x40] sm:$0xff]
    %v35 = vld [vmem:[#allocation2 + $0x48] sm:$0xff]
    %v36 = vld [vmem:[#allocation2 + $0x50] sm:$0xff]
    %v37 = vld [vmem:[#allocation2 + $0x58] sm:$0xff]
    %v38 = vld [vmem:[#allocation2 + $0x60] sm:$0xff]
    %v39 = vld [vmem:[#allocation2 + $0x68] sm:$0xff]
    %v40 = vld [vmem:[#allocation2 + $0x70] sm:$0xff]
    %v41 = vld [vmem:[#allocation2 + $0x78] sm:$0xff]
    %v42 = vld [vmem:[#allocation2 + $0x80] sm:$0xff]
    %v43 = vld [vmem:[#allocation2 + $0x88] sm:$0xff]
    %v44 = vld [vmem:[#allocation2 + $0x90] sm:$0xff]
    %v45 = vld [vmem:[#allocation2 + $0x98] sm:$0xff]
    %v46 = vld [vmem:[#allocation2 + $0xa0] sm:$0xff]
    %v47 = vld [vmem:[#allocation2 + $0xa8] sm:$0xff]
    %v48 = vld [vmem:[#allocation2 + $0xb0] sm:$0xff]
    %v49 = vld [vmem:[#allocation2 + $0xb8] sm:$0xff]
    %v50 = vld [vmem:[#allocation2 + $0xc0] sm:$0xff]
    %v51 = vld [vmem:[#allocation2 + $0xc8] sm:$0xff]
    %v52 = vld [vmem:[#allocation2 + $0xd0] sm:$0xff]
    %v53 = vld [vmem:[#allocation2 + $0xd8] sm:$0xff]
    %v54 = vld [vmem:[#allocation2 + $0xe0] sm:$0xff]
    %v55 = vld [vmem:[#allocation2 + $0xe8] sm:$0xff]
    %v56 = vld [vmem:[#allocation2 + $0xf0] sm:$0xff]
    %v57 = vld [vmem:[#allocation2 + $0xf8] sm:$0xff]
    %58 = vmatprep.subr.mxu0 %v57
    %59 = vmatpush1.msra.mxu0 %v56
    %60 = vmatprep.subr.mxu0 %v55
    %61 = vmatpush1.msra.mxu0 %v54
    %62 = vmatprep.subr.mxu0 %v53
    %63 = vmatpush1.msra.mxu0 %v52
    %64 = vmatprep.subr.mxu0 %v51
    %65 = vmatpush1.msra.mxu0 %v50
    %66 = vmatprep.subr.mxu0 %v49
    %67 = vmatpush1.msra.mxu0 %v48
    %68 = vmatprep.subr.mxu0 %v47
    %69 = vmatpush1.msra.mxu0 %v46
    %70 = vmatprep.subr.mxu0 %v45
    %71 = vmatpush1.msra.mxu0 %v44
    %72 = vmatprep.subr.mxu0 %v43
    %73 = vmatpush1.msra.mxu0 %v42
    %74 = vmatprep.subr.mxu0 %v41
    %75 = vmatpush1.msra.mxu0 %v40
    %76 = vmatprep.subr.mxu0 %v39
    %77 = vmatpush1.msra.mxu0 %v38
    %78 = vmatprep.subr.mxu0 %v37
    %79 = vmatpush1.msra.mxu0 %v36
    %80 = vmatprep.subr.mxu0 %v35
    %81 = vmatpush1.msra.mxu0 %v34
    %82 = vmatprep.subr.mxu0 %v33
    %83 = vmatpush1.msra.mxu0 %v32
    %84 = vmatprep.subr.mxu0 %v31
    %85 = vmatpush1.msra.mxu0 %v30
    %86 = vmatprep.subr.mxu0 %v29
    %87 = vmatpush1.msra.mxu0 %v28
    %88 = vmatprep.subr.mxu0 %v27
    %89 = vmatpush1.msra.mxu0 %v26
    %90 = vmatprep.subr.mxu0 0.0
    %91 = vmatpush2.msra.mxu0 0.0
    %92 = vmatprep.subr.mxu0 0.0
    %93 = vmatpush2.msra.mxu0 0.0
    %94 = vmatprep.subr.mxu0 0.0
    %95 = vmatpush2.msra.mxu0 0.0
    %96 = vmatprep.subr.mxu0 0.0
    %97 = vmatpush2.msra.mxu0 0.0
    %98 = vmatprep.subr.mxu0 0.0
    %99 = vmatpush2.msra.mxu0 0.0
    %100 = vmatprep.subr.mxu0 0.0
    %101 = vmatpush2.msra.mxu0 0.0
    %102 = vmatprep.subr.mxu0 0.0
    %103 = vmatpush2.msra.mxu0 0.0
    %104 = vmatprep.subr.mxu0 0.0
    %105 = vmatpush2.msra.mxu0 0.0
    %106 = vmatprep.subr.mxu0 0.0
    %107 = vmatpush2.msra.mxu0 0.0
    %108 = vmatprep.subr.mxu0 0.0
    %109 = vmatpush2.msra.mxu0 0.0
    %110 = vmatprep.subr.mxu0 0.0
    %111 = vmatpush2.msra.mxu0 0.0
    %112 = vmatprep.subr.mxu0 0.0
    %113 = vmatpush2.msra.mxu0 0.0
    %114 = vmatprep.subr.mxu0 0.0
    %115 = vmatpush2.msra.mxu0 0.0
    %116 = vmatprep.subr.mxu0 0.0
    %117 = vmatpush2.msra.mxu0 0.0
    %118 = vmatprep.subr.mxu0 0.0
    %119 = vmatpush2.msra.mxu0 0.0
    %120 = vmatprep.subr.mxu0 0.0
    %121 = vmatpush2.msra.mxu0 0.0
    %122 = vmatprep.mubr.f32.mxu0 0.0
    %123 = vmatmul.mubr.f32.gmra.mxu0 %v25
    %v124 = vpop.f32.mrf.mxu0
    %v125 = vadd.f32 0.0, %v124
    %v126 = vpop.f32.mrf.mxu0
    %v127 = vadd.f32 0.0, %v126
    %128 = vdwg.mxu0
    %129 = vst [vmem:[%s2] sm:$0xff] %v125
    %130 = vst [vmem:[%s2 + $0x8] sm:$0xff] %v127
    // Predicated region
    $region14: #{_isht_forward.1} parent=1 // pred_check
      _
    $region15: #{_isht_forward.1} parent=1 // pred_check_branch
      %132 = sbr.rel (0) target = $region17
    $region16: #{_isht_forward.1} parent=1 // pred_region
      _
    $region17: #{_isht_forward.1} parent=1 // pred_fallthru
      _
    // Predicated region
    $region18: #{_isht_forward.1} parent=1 // pred_check
      _
    $region19: #{_isht_forward.1} parent=1 // pred_check_branch
      %134 = sbr.rel (0) target = $region21
    $region20: #{_isht_forward.1} parent=1 // pred_region
      _
    $region21: #{_isht_forward.1} parent=1 // pred_fallthru
      _
    %135 = vsyncpa [#allocation3], 1

</llo_original>
